<compile_context>
chip_gen: v5e
topology: v5e:2x2
jax: 0.10.0
libtpu: 0.0.40
codegen_flags: <defaults>
</compile_context>

<pallas_src>
import functools
import math

import jax
import jax.numpy as jnp
from jax.experimental import pallas as pl
from jax.experimental.pallas import tpu as pltpu


def _wmse_kernel(out_ref, tgt_ref, num_ref, den_ref, *, inst_factor, w):
    i = pl.program_id(1)   # reduction steps within this row split

    @pl.when(i == 0)
    def _():
        num_ref[...] = jnp.zeros_like(num_ref)
        den_ref[...] = jnp.zeros_like(den_ref)

    t = tgt_ref[...].astype(jnp.float32)
    o = out_ref[...].astype(jnp.float32)
    rows, lanes = t.shape

    # torch.gradient(target, dim=-1)[0] on each length-w segment of the lane
    # axis: interior (t[j+1] - t[j-1]) / 2, edges one-sided first differences.
    # pltpu.roll needs non-negative shifts: shift by lanes-1 == shift by -1.
    t_next = pltpu.roll(t, shift=lanes - 1, axis=1)  # t[:, j+1] (wrap neutralized below)
    t_prev = pltpu.roll(t, shift=1, axis=1)          # t[:, j-1] (wrap neutralized below)

    # Stencil coefficients on a single (1, lanes) row (hoisted off the tile):
    #   grad = c_next*t[j+1] + c_prev*t[j-1] + c_self*t[j]
    # with one-sided differences at segment edges (== torch.gradient); the
    # edge coefficients also make the roll wrap between packed segments inert.
    # Broadcasting the f32 rows into the multiplies is a cheap sublane
    # broadcast, so per-element cost is just 3 mul + 2 add.
    col = jax.lax.broadcasted_iota(jnp.int32, (1, lanes), 1) % w
    f_l = (col == 0).astype(jnp.float32)         # left edge of a segment
    f_r = (col == (w - 1)).astype(jnp.float32)   # right edge of a segment
    f_i = 1.0 - f_l - f_r                        # interior
    c_next = f_l + 0.5 * f_i
    c_prev = -(f_r + 0.5 * f_i)
    c_self = f_r - f_l

    grad = c_next * t_next + c_prev * t_prev + c_self * t
    u = jnp.abs(grad) + jnp.float32(inst_factor)

    diff = o - t
    vnum = u * diff * diff

    # vreg-shaped accumulation: only elementwise VPU adds per step; the single
    # XLU cross-lane/sublane reduction happens once, in the wrapper.
    g = rows // 8
    num_ref[...] += jnp.sum(vnum.reshape(g, 8, lanes), axis=0)
    den_ref[...] += jnp.sum(u.reshape(g, 8, lanes), axis=0)


def _num_tensorcores():
    """2 for megacore (v4/v5p) and v7x, 1 for the single-TC 'lite' chips."""
    try:
        kind = jax.devices()[0].device_kind.lower()
    except Exception:  # detection failure: be conservative (serial loop is correct)
        return 1
    if "lite" in kind or "v5e" in kind or "v6e" in kind:
        return 1
    return 2


def weight_grad_mse_loss(output, target, inst_factor, *,
                         target_block_bytes=2 << 20, num_cores=None):
    assert output.shape == target.shape
    w = output.shape[-1]
    assert w >= 2, "torch.gradient needs at least 2 samples along dim=-1"
    r = math.prod(output.shape[:-1])
    elem_bytes = jnp.dtype(output.dtype).itemsize

    # Lane packing: fold k original rows into the lane axis so every vreg lane
    # is used.  lanes = lcm(W, 128) when that stays small; otherwise fall back
    # to lanes = W (correct, just lane-masked loads/stores).
    if w < 128:
        lcm = (w * 128) // math.gcd(w, 128)
        lanes = lcm if lcm <= 1024 else w
    else:
        lanes = w
    k = lanes // w
    rows = pl.cdiv(r, k)

    out2 = output.reshape(r, w)   # keep native dtype (no f32 upcast in HBM traffic)
    tgt2 = target.reshape(r, w)
    if rows * k != r:
        # Zero rows pad whole length-w segments; corrected analytically below.
        pad = rows * k - r
        out2 = jnp.pad(out2, ((0, pad), (0, 0)))
        tgt2 = jnp.pad(tgt2, ((0, pad), (0, 0)))
    out2 = out2.reshape(rows, lanes)
    tgt2 = tgt2.reshape(rows, lanes)

    # dtype-native sublane multiple (8 for f32, 16 for bf16, 32 for int8/fp8).
    sub = max(8, 32 // elem_bytes)
    budget_rows = max(sub, (target_block_bytes // (lanes * elem_bytes)) // sub * sub)

    # Row split across TensorCores: only on 2-TC chips, and only when each
    # core gets at least one full-budget tile (tiny inputs stay on one core).
    hw_cores = num_cores if num_cores is not None else _num_tensorcores()
    n_split = 2 if (hw_cores >= 2 and rows >= 2 * budget_rows) else 1

    per_split_rows = pl.cdiv(rows, n_split)
    tile_rows = min(budget_rows, pl.cdiv(per_split_rows, sub) * sub)
    steps = pl.cdiv(rows, n_split * tile_rows)
    padded_rows = n_split * steps * tile_rows

    if padded_rows != rows:
        pad = padded_rows - rows
        out2 = jnp.pad(out2, ((0, pad), (0, 0)))
        tgt2 = jnp.pad(tgt2, ((0, pad), (0, 0)))

    kernel = functools.partial(_wmse_kernel, inst_factor=float(inst_factor), w=w)

    block_bytes = tile_rows * lanes * elem_bytes
    # 2 inputs x 2 pipeline buffers + accumulators + headroom; cap well below
    # the 64 MiB physical VMEM of a v7x TensorCore.
    vmem_limit = int(min(32 << 20, max(16 << 20, 6 * block_bytes)))

    num, den = pl.pallas_call(
        kernel,
        out_shape=(jax.ShapeDtypeStruct((n_split, 8, lanes), jnp.float32),
                   jax.ShapeDtypeStruct((n_split, 8, lanes), jnp.float32)),
        grid_spec=pltpu.PrefetchScalarGridSpec(
            num_scalar_prefetch=0,
            grid=(n_split, steps),
            in_specs=[
                pl.BlockSpec((tile_rows, lanes), lambda p, i: (p * steps + i, 0)),
                pl.BlockSpec((tile_rows, lanes), lambda p, i: (p * steps + i, 0)),
            ],
            out_specs=[
                pl.BlockSpec((None, 8, lanes), lambda p, i: (p, 0, 0)),
                pl.BlockSpec((None, 8, lanes), lambda p, i: (p, 0, 0)),
            ],
        ),
        compiler_params=pltpu.CompilerParams(
            dimension_semantics=("parallel", "arbitrary"),
            vmem_limit_bytes=vmem_limit),
        cost_estimate=pl.CostEstimate(
            flops=16 * r * w,
            transcendentals=0,
            bytes_accessed=2 * padded_rows * lanes * elem_bytes
                           + 2 * n_split * 8 * lanes * 4),
    )(out2, tgt2)

    # Padding (all-zero length-w segments) contributes exactly inst_factor per
    # element to the denominator and 0 to the numerator: correct analytically
    # instead of masking per element inside the kernel.
    den_correction = jnp.float32((padded_rows * lanes - r * w) * float(inst_factor))
    return jnp.sum(num) / (jnp.sum(den) - den_correction)


def _reference_loss(output, target, inst_factor):
    diff = output - target
    g = jnp.gradient(target, axis=-1)
    if isinstance(g, (list, tuple)):
        g = g[0]
    wght = jnp.abs(g) + inst_factor
    wght = wght / wght.mean()
    return jnp.mean(wght * diff ** 2)


if __name__ == "__main__":
    key = jax.random.PRNGKey(0)
    k1, k2 = jax.random.split(key)
    # NCHW-style shapes: batch=2, channels=4, spatial=16x16
    output = jax.random.normal(k1, (2, 4, 16, 16), dtype=jnp.float32)
    target = jax.random.normal(k2, (2, 4, 16, 16), dtype=jnp.float32)
    inst_factor = 0.1

    loss = jax.block_until_ready(weight_grad_mse_loss(output, target, inst_factor))
    ref = jax.block_until_ready(_reference_loss(output, target, inst_factor))
    assert jnp.allclose(loss, ref, rtol=1e-5, atol=1e-6), (loss, ref)

    # Awkward width (48 does not divide 128) + ragged row count exercises the
    # lcm lane packing and the analytic denominator correction for padding.
    k3, k4 = jax.random.split(k1)
    out_b = jax.random.normal(k3, (3, 5, 48), dtype=jnp.float32)
    tgt_b = jax.random.normal(k4, (3, 5, 48), dtype=jnp.float32)
    loss_b = jax.block_until_ready(weight_grad_mse_loss(out_b, tgt_b, inst_factor))
    ref_b = jax.block_until_ready(_reference_loss(out_b, tgt_b, inst_factor))
    assert jnp.allclose(loss_b, ref_b, rtol=1e-5, atol=1e-6), (loss_b, ref_b)

    print("KERNEL_OK")
</pallas_src>

<mosaic_0001>
module attributes {stable_mosaic.version = 11 : i64} {
  func.func @_wmse_kernel(%arg0: i32, %arg1: i32, %arg2: memref<16x128xf32, #tpu.memory_space<vmem>>, %arg3: memref<16x128xf32, #tpu.memory_space<vmem>>, %arg4: memref<1x8x128xf32, #tpu.memory_space<vmem>>, %arg5: memref<1x8x128xf32, #tpu.memory_space<vmem>>) attributes {dimension_semantics = [#tpu.dimension_semantics<parallel>, #tpu.dimension_semantics<arbitrary>], iteration_bounds = array<i64: 1, 1>, scalar_prefetch = 0 : i64, scratch_operands = 0 : i64, tpu.core_type = #tpu.core_type<tc>, window_params = [{transform_indices = @transform_0, window_bounds = array<i64: 16, 128>}, {transform_indices = @transform_1, window_bounds = array<i64: 16, 128>}, {transform_indices = @transform_2, window_bounds = array<i64: 1, 8, 128>}, {transform_indices = @transform_3, window_bounds = array<i64: 1, 8, 128>}]} {
    %c0_i32 = arith.constant 0 : i32
    %0 = arith.cmpi eq, %arg1, %c0_i32 : i32
    %1 = arith.extui %0 : i1 to i32
    %c0_i32_0 = arith.constant 0 : i32
    %2 = arith.cmpi ne, %1, %c0_i32_0 : i32
    scf.if %2 {
      %cst_28 = arith.constant 0.000000e+00 : f32
      %74 = vector.broadcast %cst_28 : f32 to vector<8x128xf32>
      %c0_29 = arith.constant 0 : index
      %c0_30 = arith.constant 0 : index
      %c0_31 = arith.constant 0 : index
      %75 = vector.load %arg4[%c0_29, %c0_30, %c0_31] : memref<1x8x128xf32, #tpu.memory_space<vmem>>, vector<1x8x128xf32>
      %76 = vector.shape_cast %75 : vector<1x8x128xf32> to vector<8x128xf32>
      %77 = vector.shape_cast %74 : vector<8x128xf32> to vector<1x8x128xf32>
      tpu.vector_store %arg4[%c0_29, %c0_30, %c0_31], %77 {strides = array<i32>} : memref<1x8x128xf32, #tpu.memory_space<vmem>>, vector<1x8x128xf32>,
      %cst_32 = arith.constant 0.000000e+00 : f32
      %78 = vector.broadcast %cst_32 : f32 to vector<8x128xf32>
      %c0_33 = arith.constant 0 : index
      %c0_34 = arith.constant 0 : index
      %c0_35 = arith.constant 0 : index
      %79 = vector.load %arg5[%c0_33, %c0_34, %c0_35] : memref<1x8x128xf32, #tpu.memory_space<vmem>>, vector<1x8x128xf32>
      %80 = vector.shape_cast %79 : vector<1x8x128xf32> to vector<8x128xf32>
      %81 = vector.shape_cast %78 : vector<8x128xf32> to vector<1x8x128xf32>
      tpu.vector_store %arg5[%c0_33, %c0_34, %c0_35], %81 {strides = array<i32>} : memref<1x8x128xf32, #tpu.memory_space<vmem>>, vector<1x8x128xf32>,
    } else {
    }
    %c0 = arith.constant 0 : index
    %c0_1 = arith.constant 0 : index
    %3 = vector.load %arg3[%c0, %c0_1] : memref<16x128xf32, #tpu.memory_space<vmem>>, vector<16x128xf32>
    %c0_2 = arith.constant 0 : index
    %c0_3 = arith.constant 0 : index
    %4 = vector.load %arg2[%c0_2, %c0_3] : memref<16x128xf32, #tpu.memory_space<vmem>>, vector<16x128xf32>
    %c127_i32 = arith.constant 127 : i32
    %5 = tpu.dynamic_rotate %3 by %c127_i32 dim 1 : vector<16x128xf32>, i32 -> vector<16x128xf32>
    %c1_i32 = arith.constant 1 : i32
    %6 = tpu.dynamic_rotate %3 by %c1_i32 dim 1 : vector<16x128xf32>, i32 -> vector<16x128xf32>
    %7 = tpu.iota {dimensions = array<i32: 1>} : vector<1x128xi32>
    %c16_i32 = arith.constant 16 : i32
    %c0_i32_4 = arith.constant 0 : i32
    %8 = arith.cmpi eq, %c16_i32, %c0_i32_4 : i32
    %c1_i32_5 = arith.constant 1 : i32
    %9 = arith.select %8, %c1_i32_5, %c16_i32 : i32
    %10 = vector.broadcast %9 : i32 to vector<1x128xi32>
    %11 = arith.remsi %7, %10 : vector<1x128xi32>
    %c0_i32_6 = arith.constant 0 : i32
    %12 = vector.broadcast %c0_i32_6 : i32 to vector<1x128xi32>
    %13 = arith.cmpi ne, %11, %12 : vector<1x128xi32>
    %c0_i32_7 = arith.constant 0 : i32
    %14 = vector.broadcast %c0_i32_7 : i32 to vector<1x128xi32>
    %15 = arith.cmpi slt, %11, %14 : vector<1x128xi32>
    %c0_i32_8 = arith.constant 0 : i32
    %16 = arith.cmpi slt, %9, %c0_i32_8 : i32
    %17 = vector.broadcast %16 : i1 to vector<1x128xi1>
    %18 = vector.broadcast %17 : vector<1x128xi1> to vector<1x128xi1>
    %19 = arith.xori %15, %18 : vector<1x128xi1>
    %20 = arith.andi %19, %13 : vector<1x128xi1>
    %21 = vector.broadcast %9 : i32 to vector<1x128xi32>
    %22 = arith.addi %11, %21 : vector<1x128xi32>
    %23 = arith.select %20, %22, %11 : vector<1x128xi1>, vector<1x128xi32>
    %c0_i32_9 = arith.constant 0 : i32
    %24 = vector.broadcast %c0_i32_9 : i32 to vector<1x128xi32>
    %25 = arith.cmpi eq, %23, %24 : vector<1x128xi32>
    %26 = arith.extui %25 : vector<1x128xi1> to vector<1x128xi32>
    %27 = arith.sitofp %26 : vector<1x128xi32> to vector<1x128xf32>
    %c15_i32 = arith.constant 15 : i32
    %28 = vector.broadcast %c15_i32 : i32 to vector<1x128xi32>
    %29 = arith.cmpi eq, %23, %28 : vector<1x128xi32>
    %30 = arith.extui %29 : vector<1x128xi1> to vector<1x128xi32>
    %31 = arith.sitofp %30 : vector<1x128xi32> to vector<1x128xf32>
    %cst = arith.constant 1.000000e+00 : f32
    %32 = vector.broadcast %cst : f32 to vector<1x128xf32>
    %33 = arith.subf %32, %27 : vector<1x128xf32>
    %34 = arith.subf %33, %31 : vector<1x128xf32>
    %cst_10 = arith.constant 5.000000e-01 : f32
    %35 = vector.broadcast %cst_10 : f32 to vector<1x128xf32>
    %36 = arith.mulf %35, %34 : vector<1x128xf32>
    %37 = arith.addf %27, %36 : vector<1x128xf32>
    %cst_11 = arith.constant 5.000000e-01 : f32
    %38 = vector.broadcast %cst_11 : f32 to vector<1x128xf32>
    %39 = arith.mulf %38, %34 : vector<1x128xf32>
    %40 = arith.addf %31, %39 : vector<1x128xf32>
    %cst_12 = arith.constant 0.000000e+00 : f32
    %41 = vector.broadcast %cst_12 : f32 to vector<1x128xf32>
    %42 = arith.subf %41, %40 : vector<1x128xf32>
    %43 = arith.subf %31, %27 : vector<1x128xf32>
    %44 = vector.broadcast %37 : vector<1x128xf32> to vector<16x128xf32>
    %45 = arith.mulf %44, %5 : vector<16x128xf32>
    %46 = vector.broadcast %42 : vector<1x128xf32> to vector<16x128xf32>
    %47 = arith.mulf %46, %6 : vector<16x128xf32>
    %48 = arith.addf %45, %47 : vector<16x128xf32>
    %49 = vector.broadcast %43 : vector<1x128xf32> to vector<16x128xf32>
    %50 = arith.mulf %49, %3 : vector<16x128xf32>
    %51 = arith.addf %48, %50 : vector<16x128xf32>
    %52 = math.absf %51 : vector<16x128xf32>
    %cst_13 = arith.constant 1.000000e-01 : f32
    %53 = vector.broadcast %cst_13 : f32 to vector<16x128xf32>
    %54 = arith.addf %52, %53 : vector<16x128xf32>
    %55 = arith.subf %4, %3 : vector<16x128xf32>
    %56 = arith.mulf %54, %55 : vector<16x128xf32>
    %57 = arith.mulf %56, %55 : vector<16x128xf32>
    %c0_14 = arith.constant 0 : index
    %c0_15 = arith.constant 0 : index
    %c0_16 = arith.constant 0 : index
    %58 = vector.load %arg4[%c0_14, %c0_15, %c0_16] : memref<1x8x128xf32, #tpu.memory_space<vmem>>, vector<1x8x128xf32>
    %59 = vector.shape_cast %58 : vector<1x8x128xf32> to vector<8x128xf32>
    %60 = vector.shape_cast %57 : vector<16x128xf32> to vector<2x8x128xf32>
    %cst_17 = arith.constant dense<0.000000e+00> : vector<8x128xf32>
    %61 = vector.multi_reduction <add>, %60, %cst_17 [0] : vector<2x8x128xf32> to vector<8x128xf32>
    %62 = arith.addf %59, %61 : vector<8x128xf32>
    %c0_18 = arith.constant 0 : index
    %c0_19 = arith.constant 0 : index
    %c0_20 = arith.constant 0 : index
    %63 = vector.load %arg4[%c0_18, %c0_19, %c0_20] : memref<1x8x128xf32, #tpu.memory_space<vmem>>, vector<1x8x128xf32>
    %64 = vector.shape_cast %63 : vector<1x8x128xf32> to vector<8x128xf32>
    %65 = vector.shape_cast %62 : vector<8x128xf32> to vector<1x8x128xf32>
    tpu.vector_store %arg4[%c0_18, %c0_19, %c0_20], %65 {strides = array<i32>} : memref<1x8x128xf32, #tpu.memory_space<vmem>>, vector<1x8x128xf32>,
    %c0_21 = arith.constant 0 : index
    %c0_22 = arith.constant 0 : index
    %c0_23 = arith.constant 0 : index
    %66 = vector.load %arg5[%c0_21, %c0_22, %c0_23] : memref<1x8x128xf32, #tpu.memory_space<vmem>>, vector<1x8x128xf32>
    %67 = vector.shape_cast %66 : vector<1x8x128xf32> to vector<8x128xf32>
    %68 = vector.shape_cast %54 : vector<16x128xf32> to vector<2x8x128xf32>
    %cst_24 = arith.constant dense<0.000000e+00> : vector<8x128xf32>
    %69 = vector.multi_reduction <add>, %68, %cst_24 [0] : vector<2x8x128xf32> to vector<8x128xf32>
    %70 = arith.addf %67, %69 : vector<8x128xf32>
    %c0_25 = arith.constant 0 : index
    %c0_26 = arith.constant 0 : index
    %c0_27 = arith.constant 0 : index
    %71 = vector.load %arg5[%c0_25, %c0_26, %c0_27] : memref<1x8x128xf32, #tpu.memory_space<vmem>>, vector<1x8x128xf32>
    %72 = vector.shape_cast %71 : vector<1x8x128xf32> to vector<8x128xf32>
    %73 = vector.shape_cast %70 : vector<8x128xf32> to vector<1x8x128xf32>
    tpu.vector_store %arg5[%c0_25, %c0_26, %c0_27], %73 {strides = array<i32>} : memref<1x8x128xf32, #tpu.memory_space<vmem>>, vector<1x8x128xf32>,
    return
  }
  func.func @transform_0(%arg0: i32, %arg1: i32) -> (i32, i32) {
    %c1_i32 = arith.constant 1 : i32
    %0 = arith.muli %arg0, %c1_i32 : i32
    %1 = arith.addi %0, %arg1 : i32
    %c0_i32 = arith.constant 0 : i32
    %c0_i32_0 = arith.constant 0 : i32
    return %1, %c0_i32 : i32, i32
  }
  func.func @transform_1(%arg0: i32, %arg1: i32) -> (i32, i32) {
    %c1_i32 = arith.constant 1 : i32
    %0 = arith.muli %arg0, %c1_i32 : i32
    %1 = arith.addi %0, %arg1 : i32
    %c0_i32 = arith.constant 0 : i32
    %c0_i32_0 = arith.constant 0 : i32
    return %1, %c0_i32 : i32, i32
  }
  func.func @transform_2(%arg0: i32, %arg1: i32) -> (i32, i32, i32) {
    %c0_i32 = arith.constant 0 : i32
    %c0_i32_0 = arith.constant 0 : i32
    %c0_i32_1 = arith.constant 0 : i32
    return %arg0, %c0_i32, %c0_i32_0 : i32, i32, i32
  }
  func.func @transform_3(%arg0: i32, %arg1: i32) -> (i32, i32, i32) {
    %c0_i32 = arith.constant 0 : i32
    %c0_i32_0 = arith.constant 0 : i32
    %c0_i32_1 = arith.constant 0 : i32
    return %arg0, %c0_i32, %c0_i32_0 : i32, i32, i32
  }
}

</mosaic_0001>

<llo_original>
// kernel: tpu_custom_call.1
$region0: #{tpu_custom_call.1}
  #allocation0 [shape = 'u32[]', space=smem, size = 0x4, offset = 0x4, fixed_abs, tag = 'smem constant byte address 0x4 - core index']
  #allocation1 [shape = 'u32[72,128]{1,0:T(1,128)}', space=vmem, size = 0x9000, scoped, tag = 'internal scratch']
  %s0 = inlined_call_operand.hbm [shape: f32[16,128], index: 0, kind: input, shape index: {}]
  %s1 = inlined_call_operand.hbm [shape: f32[16,128], index: 1, kind: input, shape index: {}]
  %s2 = inlined_call_operand.hbm [shape: f32[1,8,128], index: 2, kind: output, shape index: {0}]
  %s3 = inlined_call_operand.hbm [shape: f32[1,8,128], index: 3, kind: output, shape index: {1}]
  %4 = xla_tuple %s2, %s3
  %s5 = sld [smem:[#allocation0]]
  $region38: #{tpu_custom_call.1} parent=0
    _
  %s7 = ssub.s32 1, %s5
  %s8 = scalar_select 0, %s7, %s5
  $region1: #{tpu_custom_call.1} parent=0
    #allocation2 [shape = 'u8[8192]{0}', space=vmem, size = 0x2000, scoped, tag = 'input window, operand 0, single buffered']
    #allocation3 [shape = 's32[1]{0}', space=sflag, size = 0x4, scoped, tag = 'scoped memory for tpu_custom_call.1']
    #allocation4 [shape = 's32[1]{0}', space=sflag, size = 0x4, scoped, tag = 'scoped memory for tpu_custom_call.1']
    #allocation5 [shape = 'u8[8192]{0}', space=vmem, size = 0x2000, scoped, tag = 'input window, operand 1, single buffered']
    #allocation6 [shape = 's32[1]{0}', space=sflag, size = 0x4, scoped, tag = 'scoped memory for tpu_custom_call.1']
    #allocation7 [shape = 'u8[4096]{0}', space=vmem, size = 0x1000, scoped, tag = 'output window, operand 0, single buffered']
    #allocation8 [shape = 'u8[4096]{0}', space=vmem, size = 0x1000, scoped, tag = 'output window, operand 1, single buffered']
    #allocation9 [shape = 's32[1]{0}', space=sflag, size = 0x4, scoped, tag = 'scoped memory for tpu_custom_call.1']
    %9 = vsyncpa [#allocation3], 0
    %10 = vsyncpa [#allocation6], 0
    %11 = vsyncpa [#allocation4], 0
    %12 = vsyncpa [#allocation9], 0
    // Predicated region
    $region2: #{tpu_custom_call.1} parent=1 // pred_check
      _
    $region3: #{tpu_custom_call.1} parent=1 // pred_check_branch
      %14 = sbr.rel (0) target = $region5
    $region4: #{tpu_custom_call.1} parent=1 // pred_region
      %s15 = sadd.s32 0, 0
      %s16 = smul.u32 2, %s15
      %18 = vsyncadd [#allocation3], 0
      %s19 = smul.addr %s16, 8
      %s20 = scalar_lea.hbm %s0, %s19
      %s21 = sshll.u32 %s20, 4
      %s22 = int_to_ptr.hbm [resolvable:$true] %s21
      %s23 = sshll.u32 [#allocation2], 4
      %s24 = int_to_ptr.vmem [resolvable:$true] %s23
      %29 = dma.hbm_to_vmem [thread:$0]  %s22, 256, %s24, [#allocation3], 128, 128, 8
    $region5: #{tpu_custom_call.1} parent=1 // pred_fallthru
      _
    // Predicated region
    $region6: #{tpu_custom_call.1} parent=1 // pred_check
      _
    $region7: #{tpu_custom_call.1} parent=1 // pred_check_branch
      %31 = sbr.rel (0) target = $region9
    $region8: #{tpu_custom_call.1} parent=1 // pred_region
      %s32 = sadd.s32 0, 0
      %s33 = smul.u32 2, %s32
      %35 = vsyncadd [#allocation6], 0
      %s36 = smul.addr %s33, 8
      %s37 = scalar_lea.hbm %s1, %s36
      %s38 = sshll.u32 %s37, 4
      %s39 = int_to_ptr.hbm [resolvable:$true] %s38
      %s40 = sshll.u32 [#allocation5], 4
      %s41 = int_to_ptr.vmem [resolvable:$true] %s40
      %46 = dma.hbm_to_vmem [thread:$0]  %s39, 256, %s41, [#allocation6], 128, 128, 8
    $region9: #{tpu_custom_call.1} parent=1 // pred_fallthru
      _
    // Predicated region
    $region10: #{tpu_custom_call.1} parent=1 // pred_check
      _
    $region11: #{tpu_custom_call.1} parent=1 // pred_check_branch
      %48 = sbr.rel (0) target = $region13
    $region12: #{tpu_custom_call.1} parent=1 // pred_region
      %50 = dma.done [#allocation3], 256
    $region13: #{tpu_custom_call.1} parent=1 // pred_fallthru
      _
    // Predicated region
    $region14: #{tpu_custom_call.1} parent=1 // pred_check
      _
    $region15: #{tpu_custom_call.1} parent=1 // pred_check_branch
      %52 = sbr.rel (0) target = $region17
    $region16: #{tpu_custom_call.1} parent=1 // pred_region
      %54 = dma.done [#allocation6], 256
    $region17: #{tpu_custom_call.1} parent=1 // pred_fallthru
      _
    %s55 = sadd.s32 0, 0
    %s56 = smul.u32 2, %s55
    %s57 = sadd.s32 0, 0
    %s58 = smul.u32 2, %s57
    %p59 = scmp.eq.s32.totalorder 0, 0
    // Predicated region
    $region18: #{tpu_custom_call.1} parent=1 // pred_check
      %p60 = pneg %p59
    $region19: #{tpu_custom_call.1} parent=1 // pred_check_branch
      %62 = sbr.rel (%p60) target = $region21
    $region20: #{tpu_custom_call.1} parent=1 // pred_region
      %63 = vst [vmem:[#allocation7] sm:$0xff] 0.0
      %64 = vst [vmem:[#allocation8] sm:$0xff] 0.0
    $region21: #{tpu_custom_call.1} parent=1 // pred_fallthru
      _
    %v65 = vld [vmem:[#allocation5] sm:$0xff]
    %v66 = vld [vmem:[#allocation5 + $0x8] sm:$0xff]
    %v67 = vld [vmem:[#allocation2] sm:$0xff]
    %v68 = vld [vmem:[#allocation2 + $0x8] sm:$0xff]
    %69 = vrot.lane.b32.xlu0 %v65, 127
    %v70 = vpop.permute.xlu0 %69
    %71 = vrot.lane.b32.xlu0 %v66, 127
    %v72 = vpop.permute.xlu0 %71
    %73 = vrot.lane.b32.xlu0 %v65, 1
    %v74 = vpop.permute.xlu0 %73
    %75 = vrot.lane.b32.xlu0 %v66, 1
    %v76 = vpop.permute.xlu0 %75
    %v77 = vlaneseq
    %v78 = vand.u32 %v77, 127
    %vm79 = vcmp.lt.s32.totalorder %v78, 0
    %v80 = vsub.s32 0, %v78
    %v81 = vsel %vm79, %v80, %v78
    %v82 = vshrl.u32 %v81, 4
    %v83 = vand.u32 %v81, 15
    %v84 = vsub.s32 0, %v83
    %v85 = vsel %vm79, %v84, %v83
    %vm86 = vcmp.ne.s32.totalorder %v85, 0
    %vm87 = vcmp.lt.s32.totalorder %v85, 0
    %vm88 = vmand %vm87, %vm86
    %v89 = vadd.s32 %v85, 16
    %v90 = vsel %vm88, %v89, %v85
    %vm91 = vcmp.eq.s32.totalorder %v90, 0
    %v92 = vsel %vm91, 1, 0
    %v93 = vcvt.s32.f32 %v92
    %vm94 = vcmp.eq.s32.totalorder %v90, 15
    %v95 = vsel %vm94, 1, 0
    %v96 = vcvt.s32.f32 %v95
    %v97 = vsub.f32 1.0, %v93
    %v98 = vsub.f32 %v97, %v96
    %v99 = vmul.f32 %v98, 0.5
    %v100 = vadd.f32 %v93, %v99
    %v101 = vadd.f32 %v96, %v99
    %v102 = vsub.f32 0.0, %v101
    %v103 = vsub.f32 %v96, %v93
    %v104 = vmul.f32 %v100, %v70
    %v105 = vmul.f32 %v100, %v72
    %v106 = vmul.f32 %v102, %v74
    %v107 = vmul.f32 %v102, %v76
    %v108 = vadd.f32 %v104, %v106
    %v109 = vadd.f32 %v105, %v107
    %v110 = vmul.f32 %v103, %v65
    %v111 = vmul.f32 %v103, %v66
    %v112 = vadd.f32 %v108, %v110
    %v113 = vadd.f32 %v109, %v111
    %v114 = vand.u32 2147483647, %v112
    %v115 = vand.u32 2147483647, %v113
    %v116 = vadd.f32 %v114, 0.1
    %v117 = vadd.f32 %v115, 0.1
    %v118 = vsub.f32 %v67, %v65
    %v119 = vsub.f32 %v68, %v66
    %v120 = vmul.f32 %v116, %v118
    %v121 = vmul.f32 %v117, %v119
    %v122 = vmul.f32 %v120, %v118
    %v123 = vmul.f32 %v121, %v119
    %v124 = vld [vmem:[#allocation7] sm:$0xff]
    %v125 = vadd.f32 %v122, %v123
    %v126 = vadd.f32 %v124, %v125
    %127 = vst [vmem:[#allocation7] sm:$0xff] %v126
    %v128 = vld [vmem:[#allocation8] sm:$0xff]
    %v129 = vadd.f32 %v116, %v117
    %v130 = vadd.f32 %v128, %v129
    %131 = vst [vmem:[#allocation8] sm:$0xff] %v130
    // Predicated region
    $region22: #{tpu_custom_call.1} parent=1 // pred_check
      _
    $region23: #{tpu_custom_call.1} parent=1 // pred_check_branch
      %133 = sbr.rel (0) target = $region25
    $region24: #{tpu_custom_call.1} parent=1 // pred_region
      %135 = vsyncadd [#allocation4], 0
      %s137 = sshll.u32 [#allocation7], 4
      %s138 = int_to_ptr.vmem [resolvable:$true] %s137
      %s139 = sshll.u32 %s2, 4
      %s140 = int_to_ptr.hbm [resolvable:$true] %s139
      %142 = dma.vmem_to_hbm [thread:$0]  %s138, 128, %s140, [#allocation4]
    $region25: #{tpu_custom_call.1} parent=1 // pred_fallthru
      _
    // Predicated region
    $region26: #{tpu_custom_call.1} parent=1 // pred_check
      _
    $region27: #{tpu_custom_call.1} parent=1 // pred_check_branch
      %144 = sbr.rel (0) target = $region29
    $region28: #{tpu_custom_call.1} parent=1 // pred_region
      %146 = vsyncadd [#allocation9], 0
      %s148 = sshll.u32 [#allocation8], 4
      %s149 = int_to_ptr.vmem [resolvable:$true] %s148
      %s150 = sshll.u32 %s3, 4
      %s151 = int_to_ptr.hbm [resolvable:$true] %s150
      %153 = dma.vmem_to_hbm [thread:$0]  %s149, 128, %s151, [#allocation9]
    $region29: #{tpu_custom_call.1} parent=1 // pred_fallthru
      _
    // Predicated region
    $region30: #{tpu_custom_call.1} parent=1 // pred_check
      _
    $region31: #{tpu_custom_call.1} parent=1 // pred_check_branch
      %155 = sbr.rel (0) target = $region33
    $region32: #{tpu_custom_call.1} parent=1 // pred_region
      %157 = dma.done [#allocation4], 128
    $region33: #{tpu_custom_call.1} parent=1 // pred_fallthru
      _
    // Predicated region
    $region34: #{tpu_custom_call.1} parent=1 // pred_check
      _
    $region35: #{tpu_custom_call.1} parent=1 // pred_check_branch
      %159 = sbr.rel (0) target = $region37
    $region36: #{tpu_custom_call.1} parent=1 // pred_region
      %161 = dma.done [#allocation9], 128
    $region37: #{tpu_custom_call.1} parent=1 // pred_fallthru
      _
    %162 = vsyncpa [#allocation3], 1
    %163 = vsyncpa [#allocation6], 1
    %164 = vsyncpa [#allocation4], 1
    %165 = vsyncpa [#allocation9], 1

</llo_original>
